<compile_context>
chip_gen: v7x
topology: tpu7x:2x2x1
jax: 0.10.0
libtpu: 0.0.40
codegen_flags: <defaults>
</compile_context>

<pallas_src>
import functools
import math

import jax
import jax.numpy as jnp
from jax import lax
from jax.experimental import pallas as pl
from jax.experimental.pallas import tpu as pltpu

_NOISE_STD = 0.01
_HASH_MUL = -1640531535          # 0x9E3779B1 (Knuth multiplier) as signed int32


# ----------------------------------------------------------------------------
# Pallas kernel: out = where(mask, x, series_base + noise)
# ----------------------------------------------------------------------------
def _seq_comb_mask_kernel(x_ref, m_ref, s_ref, o_ref, *,
                          row_block, n_cols, seed_mix, noise_std):
    x = x_ref[...]                               # (r_blk, L) data tile
    m = m_ref[...]                               # (r_blk, L) bool/int mask tile
    if m.dtype != jnp.bool_:
        m = m != 0
    base = s_ref[...].astype(jnp.float32)        # (1, L) or (r_blk, 1): broadcasts

    # Counter-based noise from the global flat element index: deterministic,
    # independent of the tiling, and portable (no TPU-only PRNG primitives).
    shape = x.shape
    r0 = pl.program_id(0) * row_block
    row = lax.broadcasted_iota(jnp.int32, shape, 0) + r0
    col = lax.broadcasted_iota(jnp.int32, shape, 1)
    idx = row * jnp.int32(n_cols) + col

    h = (idx ^ jnp.int32(seed_mix)) * jnp.int32(_HASH_MUL)
    h = h ^ ((h >> 16) & jnp.int32(0xFFFF))      # mask makes the shift "logical"
    u0 = (h & jnp.int32(0x7FFF)).astype(jnp.float32)
    u1 = ((h >> 15) & jnp.int32(0x7FFF)).astype(jnp.float32)
    # Sum of two uniforms -> zero-mean triangular noise with std == noise_std.
    # TODO(synk): timesynth's host-side Gaussian stream is not reproduced
    # bit-exactly; this is a bounded (|noise| <= std*sqrt(6)) approximation.
    noise = (u0 + u1 - jnp.float32(32767.0)) * jnp.float32(
        noise_std * math.sqrt(6.0) / 32768.0)

    x_star = (base + noise).astype(x.dtype)      # x itself never changes dtype
    o_ref[...] = jnp.where(m, x, x_star)


# ----------------------------------------------------------------------------
# Tiling helpers
# ----------------------------------------------------------------------------
def _pick_lane_width(B, T, D, max_lanes=16384):
    """Lane width L: multiple of 128 and of T*D, dividing B*T*D (else None)."""
    period = T * D
    step = 128 // math.gcd(period, 128)     # smallest k with (period*k) % 128 == 0
    if B % step != 0:
        return None
    k = step
    while period * k < 512 and B % (2 * k) == 0 and period * 2 * k <= max_lanes:
        k *= 2                               # grow toward >=512 unmasked lanes
    lanes = period * k
    return lanes if lanes <= max_lanes else None


def _pick_row_block(rows, row_bytes, target_bytes=1 << 20):
    """~1 MiB per buffer (HBM-roofline sweet spot), multiple of 32 rows."""
    blk = max(1, target_bytes // max(row_bytes, 1))
    if blk >= rows:
        return rows
    return min(rows, max(32, (blk // 32) * 32))


# ----------------------------------------------------------------------------
# Wrapper
# ----------------------------------------------------------------------------
def seq_comb_mask_pallas(x, mask, series, seed=0):
    """out = where(mask, x, series[t] + N(0, 0.01^2)) for x: (B, T, D)."""
    B, T, D = x.shape
    assert mask.shape == x.shape and series.shape == (T,)
    itemsize = jnp.dtype(x.dtype).itemsize
    series_f32 = series.astype(jnp.float32)
    seed_mix = (int(seed) * 0x9E3779B1 + 0x7F4A7C15) & 0xFFFFFFFF
    if seed_mix >= 1 << 31:
        seed_mix -= 1 << 32

    lane_width = _pick_lane_width(B, T, D)
    fast = lane_width is not None
    if fast:
        # Lane-dense fast path: because lanes % (T*D) == 0, the per-element
        # series value is identical on every slab row -> one resident row.
        lanes = lane_width
        rows = (B * T * D) // lanes
        x2 = x.reshape(rows, lanes)
        m2 = mask.reshape(rows, lanes)
        t_of_lane = (jnp.arange(lanes, dtype=jnp.int32) // D) % T
        s2 = series_f32[t_of_lane].reshape(1, lanes)
        n_cols = lanes
    else:
        # TODO(synk): general fallback keeps D as the lane dim (padded when
        # D % 128 != 0) and streams a lane-padded (r_blk, 1) series column.
        rows, lanes = B * T, D
        x2 = x.reshape(rows, lanes)
        m2 = mask.reshape(rows, lanes)
        s2 = jnp.tile(series_f32, B).reshape(rows, 1)
        n_cols = D

    r_blk = _pick_row_block(rows, lanes * itemsize)
    grid = (pl.cdiv(rows, r_blk),)

    data_spec = pl.BlockSpec((r_blk, lanes), lambda r: (r, 0))
    if fast:
        series_spec = pl.BlockSpec((1, lanes), lambda r: (0, 0))   # stays resident
    else:
        series_spec = pl.BlockSpec((r_blk, 1), lambda r: (r, 0))

    total = B * T * D
    cost = pl.CostEstimate(
        flops=20 * total,
        transcendentals=0,
        bytes_accessed=total * (2 * itemsize + jnp.dtype(mask.dtype).itemsize)
        + int(s2.size) * 4)

    kernel = functools.partial(
        _seq_comb_mask_kernel, row_block=r_blk, n_cols=n_cols,
        seed_mix=seed_mix, noise_std=_NOISE_STD)

    out2 = pl.pallas_call(
        kernel,
        out_shape=jax.ShapeDtypeStruct((rows, lanes), x.dtype),
        grid=grid,
        in_specs=[data_spec, data_spec, series_spec],
        out_specs=data_spec,
        compiler_params=pltpu.CompilerParams(
            dimension_semantics=("parallel",)),
        cost_estimate=cost,
    )(x2, m2, s2)
    return out2.reshape(B, T, D)


# ----------------------------------------------------------------------------
# Deterministic NARMA(order=2) series, timesynth-style, via lax.scan.
# ----------------------------------------------------------------------------
def narma_series(key, T, order=2, coefficients=(0.3, 0.05, 1.5, 0.1),
                 initial=0.0):
    assert order == 2, "this NARMA implementation is specialized to order=2"
    c0, c1, c2, c3 = coefficients
    u = jax.random.uniform(key, (T,), minval=0.0, maxval=0.5)
    head = jnp.full((min(order, T),), initial, jnp.float32)
    if T <= order:
        return head

    def step(carry, uu):
        v2, v1 = carry
        u_lag, u_prev = uu
        new = c0 * v1 + c1 * v1 * (v1 + v2) + c2 * u_lag * u_prev + c3
        return (v1, new), new

    init = (jnp.float32(initial), jnp.float32(initial))
    _, tail = lax.scan(step, init, (u[: T - order], u[order - 1 : T - 1]))
    return jnp.concatenate([head, tail.astype(jnp.float32)])


# ----------------------------------------------------------------------------
if __name__ == "__main__":
    B, T, D = 2, 8, 32

    key = jax.random.PRNGKey(0)
    kx, kmask, kts = jax.random.split(key, 3)

    x = jax.random.normal(kx, (B, T, D), dtype=jnp.float32)
    mask = jax.random.bernoulli(kmask, p=0.5, shape=(B, T, D))   # bool mask
    series = narma_series(kts, T)                                # (T,)

    out = seq_comb_mask_pallas(x, mask, series, seed=0)
    out = jax.block_until_ready(out)

    assert out.shape == (B, T, D)
    # Where the mask is True, x must pass through bit-exactly.
    assert jnp.array_equal(jnp.where(mask, out, 0.0), jnp.where(mask, x, 0.0))
    # Where the mask is False, output is the NARMA series plus bounded noise
    # (|noise| <= 0.01 * sqrt(6) ~= 0.0245 with the in-kernel sampler).
    series_b = jnp.broadcast_to(series[None, :, None], (B, T, D))
    gap = jnp.where(mask, 0.0, out - series_b)
    assert float(jnp.max(jnp.abs(gap))) <= _NOISE_STD * math.sqrt(6.0) + 1e-5
    print("KERNEL_OK")
</pallas_src>

<mosaic_0001>
module attributes {stable_mosaic.version = 11 : i64} {
  func.func @_seq_comb_mask_kernel(%arg0: i32, %arg1: memref<1x512xf32, #tpu.memory_space<vmem>>, %arg2: memref<1x512xi32, #tpu.memory_space<vmem>>, %arg3: memref<1x512xf32, #tpu.memory_space<vmem>>, %arg4: memref<1x512xf32, #tpu.memory_space<vmem>>) attributes {dimension_semantics = [#tpu.dimension_semantics<parallel>], iteration_bounds = array<i64: 1>, scalar_prefetch = 0 : i64, scratch_operands = 0 : i64, tpu.core_type = #tpu.core_type<tc>, window_params = [{transform_indices = @transform_0, window_bounds = array<i64: 1, 512>}, {transform_indices = @transform_1, window_bounds = array<i64: 1, 512>}, {pipeline_mode = #tpu.pipeline_mode<synchronous>, transform_indices = @transform_2, window_bounds = array<i64: 1, 512>}, {transform_indices = @transform_3, window_bounds = array<i64: 1, 512>}]} {
    %c0 = arith.constant 0 : index
    %c0_0 = arith.constant 0 : index
    %0 = vector.load %arg1[%c0, %c0_0] : memref<1x512xf32, #tpu.memory_space<vmem>>, vector<1x512xf32>
    %c0_1 = arith.constant 0 : index
    %c0_2 = arith.constant 0 : index
    %1 = vector.load %arg2[%c0_1, %c0_2] : memref<1x512xi32, #tpu.memory_space<vmem>>, vector<1x512xi32>
    %cst = arith.constant dense<0> : vector<1x512xi32>
    %2 = arith.cmpi ne, %1, %cst : vector<1x512xi32>
    %c0_3 = arith.constant 0 : index
    %c0_4 = arith.constant 0 : index
    %3 = vector.load %arg3[%c0_3, %c0_4] : memref<1x512xf32, #tpu.memory_space<vmem>>, vector<1x512xf32>
    %c1_i32 = arith.constant 1 : i32
    %4 = arith.muli %arg0, %c1_i32 : i32
    %5 = tpu.iota {dimensions = array<i32: 0>} : vector<1x512xi32>
    %6 = vector.broadcast %4 : i32 to vector<1x512xi32>
    %7 = arith.addi %5, %6 : vector<1x512xi32>
    %8 = tpu.iota {dimensions = array<i32: 1>} : vector<1x512xi32>
    %c512_i32 = arith.constant 512 : i32
    %9 = vector.broadcast %c512_i32 : i32 to vector<1x512xi32>
    %10 = arith.muli %7, %9 : vector<1x512xi32>
    %11 = arith.addi %10, %8 : vector<1x512xi32>
    %c2135587861_i32 = arith.constant 2135587861 : i32
    %12 = vector.broadcast %c2135587861_i32 : i32 to vector<1x512xi32>
    %13 = arith.xori %11, %12 : vector<1x512xi32>
    %c-1640531535_i32 = arith.constant -1640531535 : i32
    %14 = vector.broadcast %c-1640531535_i32 : i32 to vector<1x512xi32>
    %15 = arith.muli %13, %14 : vector<1x512xi32>
    %c16_i32 = arith.constant 16 : i32
    %16 = vector.broadcast %c16_i32 : i32 to vector<1x512xi32>
    %17 = arith.shrsi %15, %16 : vector<1x512xi32>
    %c65535_i32 = arith.constant 65535 : i32
    %18 = vector.broadcast %c65535_i32 : i32 to vector<1x512xi32>
    %19 = arith.andi %17, %18 : vector<1x512xi32>
    %20 = arith.xori %15, %19 : vector<1x512xi32>
    %c32767_i32 = arith.constant 32767 : i32
    %21 = vector.broadcast %c32767_i32 : i32 to vector<1x512xi32>
    %22 = arith.andi %20, %21 : vector<1x512xi32>
    %23 = arith.sitofp %22 : vector<1x512xi32> to vector<1x512xf32>
    %c15_i32 = arith.constant 15 : i32
    %24 = vector.broadcast %c15_i32 : i32 to vector<1x512xi32>
    %25 = arith.shrsi %20, %24 : vector<1x512xi32>
    %c32767_i32_5 = arith.constant 32767 : i32
    %26 = vector.broadcast %c32767_i32_5 : i32 to vector<1x512xi32>
    %27 = arith.andi %25, %26 : vector<1x512xi32>
    %28 = arith.sitofp %27 : vector<1x512xi32> to vector<1x512xf32>
    %29 = arith.addf %23, %28 : vector<1x512xf32>
    %cst_6 = arith.constant 3.276700e+04 : f32
    %30 = vector.broadcast %cst_6 : f32 to vector<1x512xf32>
    %31 = arith.subf %29, %30 : vector<1x512xf32>
    %cst_7 = arith.constant 7.4752495E-7 : f32
    %32 = vector.broadcast %cst_7 : f32 to vector<1x512xf32>
    %33 = arith.mulf %31, %32 : vector<1x512xf32>
    %34 = arith.addf %3, %33 : vector<1x512xf32>
    %35 = arith.select %2, %0, %34 : vector<1x512xi1>, vector<1x512xf32>
    %c0_8 = arith.constant 0 : index
    %c0_9 = arith.constant 0 : index
    %36 = vector.load %arg4[%c0_8, %c0_9] : memref<1x512xf32, #tpu.memory_space<vmem>>, vector<1x512xf32>
    tpu.vector_store %arg4[%c0_8, %c0_9], %35 {strides = array<i32>} : memref<1x512xf32, #tpu.memory_space<vmem>>, vector<1x512xf32>,
    return
  }
  func.func @transform_0(%arg0: i32) -> (i32, i32) {
    %c0_i32 = arith.constant 0 : i32
    %c0_i32_0 = arith.constant 0 : i32
    return %arg0, %c0_i32 : i32, i32
  }
  func.func @transform_1(%arg0: i32) -> (i32, i32) {
    %c0_i32 = arith.constant 0 : i32
    %c0_i32_0 = arith.constant 0 : i32
    return %arg0, %c0_i32 : i32, i32
  }
  func.func @transform_2(%arg0: i32) -> (i32, i32) {
    %c0_i32 = arith.constant 0 : i32
    %c0_i32_0 = arith.constant 0 : i32
    %c0_i32_1 = arith.constant 0 : i32
    return %c0_i32, %c0_i32_0 : i32, i32
  }
  func.func @transform_3(%arg0: i32) -> (i32, i32) {
    %c0_i32 = arith.constant 0 : i32
    %c0_i32_0 = arith.constant 0 : i32
    return %arg0, %c0_i32 : i32, i32
  }
}

</mosaic_0001>

<llo_original>
// kernel: tpu_custom_call.1
$region0: #{tpu_custom_call.1}
  #allocation0 [shape = 'u32[]', space=smem, size = 0x4, offset = 0x4, fixed_abs, tag = 'smem constant byte address 0x4 - core index']
  #allocation1 [shape = 'u32[144,128]{1,0:T(1,128)}', space=vmem, size = 0x12000, scoped, tag = 'internal scratch']
  %s0 = inlined_call_operand.vmem [shape: f32[1,512], index: 0, kind: input, shape index: {}]
  %s1 = inlined_call_operand.vmem [shape: s32[1,512], index: 1, kind: input, shape index: {}]
  %s2 = inlined_call_operand.vmem [shape: f32[1,512], index: 2, kind: input, shape index: {}]
  %s3 = inlined_call_operand.hbm [shape: f32[1,512], index: 3, kind: output, shape index: {}]
  %s4 = sld [smem:[#allocation0]]
  $region22: #{tpu_custom_call.1} parent=0
    _
  %s6 = ssub.s32 1, %s4
  %s7 = scalar_select 0, %s6, %s4
  $region1: #{tpu_custom_call.1} parent=0
    #allocation2 [shape = 'u8[2048]{0}', space=vmem, size = 0x800, scoped, tag = 'output window, operand 0, single buffered']
    #allocation3 [shape = 's32[1]{0}', space=sflag, size = 0x4, scoped, tag = 'scoped memory for tpu_custom_call.1']
    %8 = vsyncpa [#allocation3], 0
    // Predicated region
    $region2: #{tpu_custom_call.1} parent=1 // pred_check
      _
    $region3: #{tpu_custom_call.1} parent=1 // pred_check_branch
      %10 = sbr.rel (0) target = $region5
    $region4: #{tpu_custom_call.1} parent=1 // pred_region
      _
    $region5: #{tpu_custom_call.1} parent=1 // pred_fallthru
      _
    // Predicated region
    $region6: #{tpu_custom_call.1} parent=1 // pred_check
      _
    $region7: #{tpu_custom_call.1} parent=1 // pred_check_branch
      %12 = sbr.rel (0) target = $region9
    $region8: #{tpu_custom_call.1} parent=1 // pred_region
      _
    $region9: #{tpu_custom_call.1} parent=1 // pred_fallthru
      _
    // Predicated region
    $region10: #{tpu_custom_call.1} parent=1 // pred_check
      _
    $region11: #{tpu_custom_call.1} parent=1 // pred_check_branch
      %14 = sbr.rel (0) target = $region13
    $region12: #{tpu_custom_call.1} parent=1 // pred_region
      _
    $region13: #{tpu_custom_call.1} parent=1 // pred_fallthru
      _
    %v15 = vld [vmem:[%s0] sm:$0xf]
    %v16 = vld [vmem:[%s1] sm:$0xf]
    %vm17 = vcmp.ne.s32.totalorder %v16, 0
    %v18 = vld [vmem:[%s2] sm:$0xf]
    %v19 = vlaneseq
    %v20 = vshrl.u32 %v19, 7
    %v21 = vstv 0
    %v22 = vadd.s32 %v20, %v21
    %v23 = vlaneseq
    %v24 = vand.u32 %v23, 127
    %v25 = vadd.s32 %v24, 128
    %v26 = vadd.s32 %v24, 256
    %v27 = vadd.s32 %v24, 384
    %v28 = vmul.u32 %v22, 512
    %v29 = vadd.s32 %v28, %v24
    %v30 = vadd.s32 %v28, %v25
    %v31 = vadd.s32 %v28, %v26
    %v32 = vadd.s32 %v28, %v27
    %v33 = vxor.u32 %v29, 2135587861
    %v34 = vxor.u32 %v30, 2135587861
    %v35 = vxor.u32 %v31, 2135587861
    %v36 = vxor.u32 %v32, 2135587861
    %v37 = vmul.u32 %v33, 2654435761
    %v38 = vmul.u32 %v34, 2654435761
    %v39 = vmul.u32 %v35, 2654435761
    %v40 = vmul.u32 %v36, 2654435761
    %v41 = vshra.s32 %v37, 16
    %v42 = vshra.s32 %v38, 16
    %v43 = vshra.s32 %v39, 16
    %v44 = vshra.s32 %v40, 16
    %v45 = vand.u32 %v41, 65535
    %v46 = vand.u32 %v42, 65535
    %v47 = vand.u32 %v43, 65535
    %v48 = vand.u32 %v44, 65535
    %v49 = vxor.u32 %v37, %v45
    %v50 = vxor.u32 %v38, %v46
    %v51 = vxor.u32 %v39, %v47
    %v52 = vxor.u32 %v40, %v48
    %v53 = vand.u32 %v49, 32767
    %v54 = vand.u32 %v50, 32767
    %v55 = vand.u32 %v51, 32767
    %v56 = vand.u32 %v52, 32767
    %v57 = vcvt.s32.f32 %v53
    %v58 = vcvt.s32.f32 %v54
    %v59 = vcvt.s32.f32 %v55
    %v60 = vcvt.s32.f32 %v56
    %v61 = vshra.s32 %v49, 15
    %v62 = vshra.s32 %v50, 15
    %v63 = vshra.s32 %v51, 15
    %v64 = vshra.s32 %v52, 15
    %v65 = vand.u32 %v61, 32767
    %v66 = vand.u32 %v62, 32767
    %v67 = vand.u32 %v63, 32767
    %v68 = vand.u32 %v64, 32767
    %v69 = vcvt.s32.f32 %v65
    %v70 = vcvt.s32.f32 %v66
    %v71 = vcvt.s32.f32 %v67
    %v72 = vcvt.s32.f32 %v68
    %v73 = vadd.f32 %v57, %v69
    %v74 = vadd.f32 %v58, %v70
    %v75 = vadd.f32 %v59, %v71
    %v76 = vadd.f32 %v60, %v72
    %v77 = vsub.f32 %v73, 32767.0
    %v78 = vsub.f32 %v74, 32767.0
    %v79 = vsub.f32 %v75, 32767.0
    %v80 = vsub.f32 %v76, 32767.0
    %v81 = vmul.f32 %v77, 7.4752495e-07
    %v82 = vmul.f32 %v78, 7.4752495e-07
    %v83 = vmul.f32 %v79, 7.4752495e-07
    %v84 = vmul.f32 %v80, 7.4752495e-07
    %v89 = vcombine.low %v81, %v82
    %v90 = vcombine.low %v83, %v84
    %v92 = vunpack.c.l.s4 1966171168
    %v93 = vunpack.c.0.s8 %v92
    %v94 = vlaneseq
    %v95 = vshrl.u32 %v94, 7
    %v96 = vsub.s32 %v93, %v95
    %v97 = vrot.slane %v89, %v96
    %v99 = vunpack.c.l.s4 1966171168
    %v100 = vunpack.c.0.s8 %v99
    %v101 = vlaneseq
    %v102 = vshrl.u32 %v101, 7
    %v103 = vsub.s32 %v100, %v102
    %v104 = vrot.slane %v90, %v103
    %v105 = vcombine.low %v97, %v104
    %v107 = vunpack.c.l.s4 1966171168
    %v108 = vunpack.c.0.s8 %v107
    %v109 = vlaneseq
    %v110 = vshrl.u32 %v109, 7
    %v111 = vsub.s32 %v108, %v110
    %v112 = vrot.slane %v105, %v111
    %v114 = vadd.f32 %v18, %v112
    %v115 = vsel %vm17, %v15, %v114
    %v116 = vlaneseq
    %vm117 = vcmp.ge.s32.totalorder %v116, 0
    %vm118 = vcmp.lt.s32.totalorder %v116, 512
    %vm119 = vmand %vm117, %vm118
    %120 = vst.msk [vmem:[#allocation2] sm:$0xf] %vm119, %v115
    // Predicated region
    $region14: #{tpu_custom_call.1} parent=1 // pred_check
      _
    $region15: #{tpu_custom_call.1} parent=1 // pred_check_branch
      %122 = sbr.rel (0) target = $region17
    $region16: #{tpu_custom_call.1} parent=1 // pred_region
      %s124 = ssub.s32 64, 64
      %125 = vsyncadd [#allocation3], %s124
      %s127 = sshll.u32 [#allocation2], 4
      %s128 = int_to_ptr.vmem [resolvable:$true] %s127
      %130 = dma.vmem_to_hbm [thread:$0]  %s128, 64, %s3, [#allocation3]
    $region17: #{tpu_custom_call.1} parent=1 // pred_fallthru
      _
    // Predicated region
    $region18: #{tpu_custom_call.1} parent=1 // pred_check
      _
    $region19: #{tpu_custom_call.1} parent=1 // pred_check_branch
      %132 = sbr.rel (0) target = $region21
    $region20: #{tpu_custom_call.1} parent=1 // pred_region
      %133 = dma.done [#allocation3], 64
    $region21: #{tpu_custom_call.1} parent=1 // pred_fallthru
      _
    %134 = vsyncpa [#allocation3], 1

</llo_original>
